<compile_context>
chip_gen: v7x
topology: tpu7x:2x2x1
jax: 0.10.0
libtpu: 0.0.40
codegen_flags: <defaults>
</compile_context>

<pallas_src>
import functools

import jax
import jax.numpy as jnp
from jax.experimental import pallas as pl
from jax.experimental.pallas import tpu as pltpu

CP = 128          # feature channels padded to one full lane tile (lane dense)
MIN_LEVEL = 2     # first FPN level (detectron2 "p2")


def _round_up(x, m):
    return (x + m - 1) // m * m


# --------------------------- Pallas kernels ---------------------------------

def _conv_matmul_kernel(patches_ref, w_ref, b_ref, out_ref):
    # One M-tile of the stride-s conv: bf16 patches @ bf16 weights on the MXU,
    # f32 accumulate, bias + ReLU fused.  Pixel normalization is already
    # folded into w/b by the caller.
    acc = jnp.dot(patches_ref[...], w_ref[...],
                  preferred_element_type=jnp.float32)
    out_ref[...] = jnp.maximum(acc + b_ref[...], 0.0)


def conv_as_matmul(patches, w, b, *, tm=512):
    """Stride-s conv (already patchified) as a tiled, pipelined MXU matmul.

    patches [M, K], w [K, CP], b [CP]  ->  feat [M, CP] float32 (ReLU'd).
    The grid tiles M so the weight/bias stay resident while A/out blocks are
    double-buffered; the M axis is 'parallel' so a 2-TC chip (v7x) can shard it.
    """
    M, K = patches.shape
    Kw, Cp = w.shape
    assert K == Kw
    tm = min(tm, _round_up(M, 8))
    Mp = _round_up(M, tm)
    if Mp != M:
        patches = jnp.pad(patches, ((0, Mp - M), (0, 0)))
    patches = patches.astype(jnp.bfloat16)
    w = w.astype(jnp.bfloat16)
    bias2 = b.reshape(1, Cp).astype(jnp.float32)

    out = pl.pallas_call(
        _conv_matmul_kernel,
        out_shape=jax.ShapeDtypeStruct((Mp, Cp), jnp.float32),
        grid_spec=pltpu.PrefetchScalarGridSpec(
            num_scalar_prefetch=0,
            grid=(Mp // tm,),
            in_specs=[
                pl.BlockSpec((tm, K), lambda i: (i, 0)),
                pl.BlockSpec((K, Cp), lambda i: (0, 0)),   # weights resident
                pl.BlockSpec((1, Cp), lambda i: (0, 0)),   # bias resident
            ],
            out_specs=pl.BlockSpec((tm, Cp), lambda i: (i, 0)),
        ),
        compiler_params=pltpu.CompilerParams(
            dimension_semantics=("parallel",),
            # tiles are a few hundred KiB double-buffered -> ample headroom on
            # v5e (16 MiB default scoped) and v7x (64 MiB physical VMEM).
            vmem_limit_bytes=32 * 1024 * 1024,
        ),
    )(patches, w, bias2)
    return out[:M] if Mp != M else out


def _roi_ycontract_kernel(levels_ref, *refs, num_levels, min_level):
    # refs = [wy_0, feat_0, ..., wy_{L-1}, feat_{L-1}, t_0, ..., t_{L-1}]
    # For box b (grid axis 0), on its FPN level only:
    #   t_l[b] = wy_l[b] @ feat_l          ([osz, Hs] @ [Hs, Ws*CP])
    b = pl.program_id(0)
    lvl = levels_ref[b]
    for li in range(num_levels):
        wy_ref = refs[2 * li]
        feat_ref = refs[2 * li + 1]
        t_ref = refs[2 * num_levels + li]

        @pl.when(lvl == min_level + li)
        def _(wy_ref=wy_ref, feat_ref=feat_ref, t_ref=t_ref):
            t_ref[0] = jnp.dot(wy_ref[0], feat_ref[...],
                               preferred_element_type=jnp.float32)

        @pl.when(lvl != min_level + li)
        def _(t_ref=t_ref):
            t_ref[...] = jnp.zeros(t_ref.shape, t_ref.dtype)


def _roi_xcontract_kernel(levels_ref, *refs, num_levels, min_level, osz):
    # refs = [wx_0, t_0, ..., wx_{L-1}, t_{L-1}, out]
    # For box b, on its FPN level only, for each output row oy:
    #   out[b, oy] = wx_l[b] @ t_l[b, oy]   ([osz, Ws] @ [Ws, CP])
    b = pl.program_id(0)
    lvl = levels_ref[b]
    out_ref = refs[-1]
    for li in range(num_levels):
        wx_ref = refs[2 * li]
        t_ref = refs[2 * li + 1]

        @pl.when(lvl == min_level + li)
        def _(wx_ref=wx_ref, t_ref=t_ref):
            for oy in range(osz):  # static, unrolled
                out_ref[0, oy] = jnp.dot(wx_ref[0], t_ref[0, oy],
                                         preferred_element_type=jnp.float32)


def roi_pool(levels, wy_list, wx_list, feat_list, dims, *, osz, num_boxes,
             min_level):
    """Multi-level ROIAlign as two per-box separable Pallas matmul passes."""
    L = len(feat_list)
    cp = feat_list[0].shape[-1]

    # ---- stage 1: y-contraction (per box, on its level) ----------------------
    feat2d = [feat_list[li].reshape(dims[li][0], dims[li][1] * cp)
              for li in range(L)]                       # [Hs, Ws*CP], free reshape
    ins, in_specs = [], []
    for li in range(L):
        hs, ws = dims[li]
        ins += [wy_list[li], feat2d[li]]
        in_specs += [pl.BlockSpec((1, osz, hs), lambda b, lv: (b, 0, 0)),
                     pl.BlockSpec((hs, ws * cp), lambda b, lv: (0, 0))]
    out_shape1 = tuple(
        jax.ShapeDtypeStruct((num_boxes, osz, dims[li][1] * cp), jnp.float32)
        for li in range(L))
    out_specs1 = tuple(
        pl.BlockSpec((1, osz, dims[li][1] * cp), lambda b, lv: (b, 0, 0))
        for li in range(L))
    t_list = pl.pallas_call(
        functools.partial(_roi_ycontract_kernel, num_levels=L,
                          min_level=min_level),
        out_shape=out_shape1,
        grid_spec=pltpu.PrefetchScalarGridSpec(
            num_scalar_prefetch=1,            # per-box FPN level in SMEM
            grid=(num_boxes,),
            in_specs=in_specs,
            out_specs=out_specs1,
        ),
        compiler_params=pltpu.CompilerParams(
            dimension_semantics=("parallel",)),
    )(levels, *ins)

    # ---- stage 2: x-contraction -> pooled [NB, osz, osz, CP] (lane dense) ----
    ins2, in_specs2 = [], []
    for li in range(L):
        hs, ws = dims[li]
        t4 = t_list[li].reshape(num_boxes, osz, ws, cp)  # free reshape in XLA
        ins2 += [wx_list[li], t4]
        in_specs2 += [pl.BlockSpec((1, osz, ws), lambda b, lv: (b, 0, 0)),
                      pl.BlockSpec((1, osz, ws, cp), lambda b, lv: (b, 0, 0, 0))]
    pooled = pl.pallas_call(
        functools.partial(_roi_xcontract_kernel, num_levels=L,
                          min_level=min_level, osz=osz),
        out_shape=jax.ShapeDtypeStruct((num_boxes, osz, osz, cp), jnp.float32),
        grid_spec=pltpu.PrefetchScalarGridSpec(
            num_scalar_prefetch=1,
            grid=(num_boxes,),
            in_specs=in_specs2,
            out_specs=pl.BlockSpec((1, osz, osz, cp),
                                   lambda b, lv: (b, 0, 0, 0)),
        ),
        compiler_params=pltpu.CompilerParams(
            dimension_semantics=("parallel",)),
    )(levels, *ins2)
    return pooled


# --------------------------- JAX glue ----------------------------------------

def space_to_depth(img_chw, stride):
    """[C, H, W] -> [(H/s)*(W/s), C*s*s] so the stride-s conv is a matmul.
    TODO(synk): could be folded into the conv BlockSpec index_map to avoid the
    XLA-materialized copy; here it is at least emitted in bf16 downstream."""
    C, H, W = img_chw.shape
    Hs, Ws = H // stride, W // stride
    x = img_chw.reshape(C, Hs, stride, Ws, stride)
    x = jnp.transpose(x, (1, 3, 0, 2, 4))          # [Hs, Ws, C, s, s]
    return x.reshape(Hs * Ws, C * stride * stride)


def bilinear_weights(boxes, Hs, Ws, scale, out_size):
    """Separable ROIAlign (aligned=True) bilinear weights.
    Returns wy [NB, out, Hs], wx [NB, out, Ws] -- O(NB*out*(Hs+Ws)), tiny,
    instead of the dense [NB, out*out, Hs*Ws] sampling matrix.
    TODO(synk): detectron2 sampling_ratio=0 averages ceil(roi/bin) samples per
    bin; this uses a single sample at each bin center (sampling_ratio=1)."""
    x1 = boxes[:, 0] * scale - 0.5
    y1 = boxes[:, 1] * scale - 0.5
    x2 = boxes[:, 2] * scale - 0.5
    y2 = boxes[:, 3] * scale - 0.5
    bw = (x2 - x1) / out_size
    bh = (y2 - y1) / out_size
    idx = jnp.arange(out_size, dtype=jnp.float32) + 0.5
    cx = jnp.clip(x1[:, None] + idx[None, :] * bw[:, None], 0.0, Ws - 1.0)
    cy = jnp.clip(y1[:, None] + idx[None, :] * bh[:, None], 0.0, Hs - 1.0)
    gx = jnp.arange(Ws, dtype=jnp.float32)
    gy = jnp.arange(Hs, dtype=jnp.float32)
    wx = jnp.maximum(0.0, 1.0 - jnp.abs(cx[:, :, None] - gx[None, None, :]))
    wy = jnp.maximum(0.0, 1.0 - jnp.abs(cy[:, :, None] - gy[None, None, :]))
    return wy, wx


def assign_levels(boxes, min_level, max_level,
                  canonical_size=224.0, canonical_level=4.0):
    """detectron2 assign_boxes_to_levels."""
    area = (boxes[:, 2] - boxes[:, 0]) * (boxes[:, 3] - boxes[:, 1])
    lvl = jnp.floor(canonical_level
                    + jnp.log2(jnp.sqrt(area) / canonical_size + 1e-8))
    return jnp.clip(lvl, min_level, max_level).astype(jnp.int32)


# --------------------------- Model -------------------------------------------

class FeaturePredictorPallas:
    def __init__(self, key, out_channels=32, strides=(4, 8), out_size=7):
        self.out_channels = out_channels
        self.strides = strides
        self.out_size = out_size
        pixel_mean = jnp.array([103.53, 116.28, 123.675], jnp.float32)
        pixel_std = jnp.array([57.375, 57.12, 58.395], jnp.float32)
        self.weights, self.biases = [], []
        for li, s in enumerate(strides):
            kw, kb = jax.random.split(jax.random.fold_in(key, li))
            kin = 3 * s * s
            w = jax.random.normal(kw, (kin, out_channels), jnp.float32)
            w = w * (1.0 / jnp.sqrt(float(kin)))
            b = 0.01 * jax.random.normal(kb, (out_channels,), jnp.float32)
            # Fold (x - mean)/std pixel normalization into the conv:
            #   conv((x-m)/sd) = (w/sd) @ x + (b - (m/sd) @ w)
            mean_k = jnp.repeat(pixel_mean, s * s)   # patch cols are channel-major
            std_k = jnp.repeat(pixel_std, s * s)
            w_fold = w / std_k[:, None]
            b_fold = b - (mean_k / std_k) @ w
            # Pad output channels to CP=128 -> lane-dense feature stores.
            w_fold = jnp.pad(w_fold, ((0, 0), (0, CP - out_channels)))
            b_fold = jnp.pad(b_fold, (0, CP - out_channels))
            self.weights.append(w_fold.astype(jnp.bfloat16))
            self.biases.append(b_fold.astype(jnp.float32))

    def __call__(self, original_image, boxes):
        H, W = original_image.shape[:2]
        boxes = boxes.astype(jnp.float32)
        nb = boxes.shape[0]
        osz = self.out_size

        # preprocess_image: HWC -> CHW; normalization folded into conv weights.
        img = jnp.transpose(original_image.astype(jnp.float32), (2, 0, 1))

        # backbone: per-level stride-s conv as patchify + tiled bf16 MXU matmul.
        feats, dims = [], []
        for s, w, b in zip(self.strides, self.weights, self.biases):
            hs, ws = H // s, W // s
            patches = space_to_depth(img, s)            # [hs*ws, 3*s*s]
            feats.append(conv_as_matmul(patches, w, b))  # [hs*ws, CP] f32
            dims.append((hs, ws))

        # box_pooler: separable, level-gated ROIAlign in Pallas.
        max_level = MIN_LEVEL + len(self.strides) - 1
        levels = assign_levels(boxes, MIN_LEVEL, max_level)
        wy_list, wx_list = [], []
        for li, s in enumerate(self.strides):
            hs, ws = dims[li]
            wy, wx = bilinear_weights(boxes, hs, ws, 1.0 / s, osz)
            wy_list.append(wy)
            wx_list.append(wx)

        pooled = roi_pool(levels, wy_list, wx_list, feats, dims,
                          osz=osz, num_boxes=nb, min_level=MIN_LEVEL)
        pooled = pooled[..., : self.out_channels]        # [nb, 7, 7, C]
        return jnp.transpose(pooled, (0, 3, 1, 2))       # [nb, C, 7, 7]


# --------------------------- Demo --------------------------------------------

if __name__ == "__main__":
    key = jax.random.PRNGKey(0)
    k_img, k_box1, k_box2, k_w = jax.random.split(key, 4)

    H, W = 32, 32
    original_image = jax.random.uniform(k_img, (H, W, 3),
                                        minval=0.0, maxval=255.0)
    num_boxes = 3
    xy1 = jax.random.uniform(k_box1, (num_boxes, 2), minval=0.0, maxval=14.0)
    wh = jax.random.uniform(k_box2, (num_boxes, 2), minval=4.0, maxval=16.0)
    boxes = jnp.concatenate([xy1, xy1 + wh], axis=1)     # (x1, y1, x2, y2)

    model = FeaturePredictorPallas(k_w, out_channels=32, strides=(4, 8),
                                   out_size=7)
    box_features = model(original_image, boxes)
    jax.block_until_ready(box_features)
    assert box_features.shape == (num_boxes, 32, 7, 7)
    assert bool(jnp.all(jnp.isfinite(box_features)))
    print("KERNEL_OK")
</pallas_src>

<mosaic_0001>
module attributes {stable_mosaic.version = 11 : i64} {
  func.func @_conv_matmul_kernel(%arg0: i32, %arg1: memref<64x48xbf16, #tpu.memory_space<vmem>>, %arg2: memref<48x128xbf16, #tpu.memory_space<vmem>>, %arg3: memref<1x128xf32, #tpu.memory_space<vmem>>, %arg4: memref<64x128xf32, #tpu.memory_space<vmem>>) attributes {dimension_semantics = [#tpu.dimension_semantics<parallel>], iteration_bounds = array<i64: 1>, scalar_prefetch = 0 : i64, scratch_operands = 0 : i64, tpu.core_type = #tpu.core_type<tc>, window_params = [{transform_indices = @transform_0, window_bounds = array<i64: 64, 48>}, {pipeline_mode = #tpu.pipeline_mode<synchronous>, transform_indices = @transform_1, window_bounds = array<i64: 48, 128>}, {pipeline_mode = #tpu.pipeline_mode<synchronous>, transform_indices = @transform_2, window_bounds = array<i64: 1, 128>}, {transform_indices = @transform_3, window_bounds = array<i64: 64, 128>}]} {
    %c0 = arith.constant 0 : index
    %c0_0 = arith.constant 0 : index
    %0 = vector.load %arg1[%c0, %c0_0] : memref<64x48xbf16, #tpu.memory_space<vmem>>, vector<64x48xbf16>
    %c0_1 = arith.constant 0 : index
    %c0_2 = arith.constant 0 : index
    %1 = vector.load %arg2[%c0_1, %c0_2] : memref<48x128xbf16, #tpu.memory_space<vmem>>, vector<48x128xbf16>
    %cst = arith.constant dense<0.000000e+00> : vector<64x128xf32>
    %2 = tpu.matmul %0, %1, %cst {dimension_numbers = #tpu.dot_dimension_numbers<[1], [0], [0], [1], [0, 0, 1, 1], [], []>} : vector<64x48xbf16>, vector<48x128xbf16>, vector<64x128xf32> -> vector<64x128xf32>
    %c0_3 = arith.constant 0 : index
    %c0_4 = arith.constant 0 : index
    %3 = vector.load %arg3[%c0_3, %c0_4] : memref<1x128xf32, #tpu.memory_space<vmem>>, vector<1x128xf32>
    %4 = vector.broadcast %3 : vector<1x128xf32> to vector<64x128xf32>
    %5 = arith.addf %2, %4 : vector<64x128xf32>
    %cst_5 = arith.constant 0.000000e+00 : f32
    %6 = vector.broadcast %cst_5 : f32 to vector<64x128xf32>
    %7 = arith.maximumf %5, %6 : vector<64x128xf32>
    %c0_6 = arith.constant 0 : index
    %c0_7 = arith.constant 0 : index
    %8 = vector.load %arg4[%c0_6, %c0_7] : memref<64x128xf32, #tpu.memory_space<vmem>>, vector<64x128xf32>
    tpu.vector_store %arg4[%c0_6, %c0_7], %7 {strides = array<i32>} : memref<64x128xf32, #tpu.memory_space<vmem>>, vector<64x128xf32>,
    return
  }
  func.func @transform_0(%arg0: i32) -> (i32, i32) {
    %c0_i32 = arith.constant 0 : i32
    %c0_i32_0 = arith.constant 0 : i32
    return %arg0, %c0_i32 : i32, i32
  }
  func.func @transform_1(%arg0: i32) -> (i32, i32) {
    %c0_i32 = arith.constant 0 : i32
    %c0_i32_0 = arith.constant 0 : i32
    %c0_i32_1 = arith.constant 0 : i32
    return %c0_i32, %c0_i32_0 : i32, i32
  }
  func.func @transform_2(%arg0: i32) -> (i32, i32) {
    %c0_i32 = arith.constant 0 : i32
    %c0_i32_0 = arith.constant 0 : i32
    %c0_i32_1 = arith.constant 0 : i32
    return %c0_i32, %c0_i32_0 : i32, i32
  }
  func.func @transform_3(%arg0: i32) -> (i32, i32) {
    %c0_i32 = arith.constant 0 : i32
    %c0_i32_0 = arith.constant 0 : i32
    return %arg0, %c0_i32 : i32, i32
  }
}

</mosaic_0001>

<llo_original>
// kernel: tpu_custom_call.1
$region0: #{tpu_custom_call.1}
  #allocation0 [shape = 'u32[]', space=smem, size = 0x4, offset = 0x4, fixed_abs, tag = 'smem constant byte address 0x4 - core index']
  #allocation1 [shape = 'u32[144,128]{1,0:T(1,128)}', space=vmem, size = 0x12000, scoped, tag = 'internal scratch']
  %s0 = inlined_call_operand.vmem [shape: bf16[64,48], index: 0, kind: input, shape index: {}]
  %s1 = inlined_call_operand.vmem [shape: bf16[48,128], index: 1, kind: input, shape index: {}]
  %s2 = inlined_call_operand.vmem [shape: f32[1,128], index: 2, kind: input, shape index: {}]
  %s3 = inlined_call_operand.hbm [shape: f32[64,128], index: 3, kind: output, shape index: {}]
  %s4 = sld [smem:[#allocation0]]
  $region22: #{tpu_custom_call.1} parent=0
    _
  %s6 = ssub.s32 1, %s4
  %s7 = scalar_select 0, %s6, %s4
  $region1: #{tpu_custom_call.1} parent=0
    #allocation2 [shape = 'u8[32768]{0}', space=vmem, size = 0x8000, scoped, tag = 'output window, operand 0, single buffered']
    #allocation3 [shape = 's32[1]{0}', space=sflag, size = 0x4, scoped, tag = 'scoped memory for tpu_custom_call.1']
    %8 = vsyncpa [#allocation3], 0
    // Predicated region
    $region2: #{tpu_custom_call.1} parent=1 // pred_check
      _
    $region3: #{tpu_custom_call.1} parent=1 // pred_check_branch
      %10 = sbr.rel (0) target = $region5
    $region4: #{tpu_custom_call.1} parent=1 // pred_region
      _
    $region5: #{tpu_custom_call.1} parent=1 // pred_fallthru
      _
    // Predicated region
    $region6: #{tpu_custom_call.1} parent=1 // pred_check
      _
    $region7: #{tpu_custom_call.1} parent=1 // pred_check_branch
      %12 = sbr.rel (0) target = $region9
    $region8: #{tpu_custom_call.1} parent=1 // pred_region
      _
    $region9: #{tpu_custom_call.1} parent=1 // pred_fallthru
      _
    // Predicated region
    $region10: #{tpu_custom_call.1} parent=1 // pred_check
      _
    $region11: #{tpu_custom_call.1} parent=1 // pred_check_branch
      %14 = sbr.rel (0) target = $region13
    $region12: #{tpu_custom_call.1} parent=1 // pred_region
      _
    $region13: #{tpu_custom_call.1} parent=1 // pred_fallthru
      _
    %v16 = vld [vmem:[%s0] sm:$0xf]
    %v17 = vld [vmem:[%s0 + $0x4] sm:$0xf]
    %v18 = vld [vmem:[%s0 + $0x8] sm:$0xf]
    %v19 = vld [vmem:[%s0 + $0xc] sm:$0xf]
    %v20 = vld [vmem:[%s0 + $0x10] sm:$0xf]
    %v21 = vld [vmem:[%s0 + $0x14] sm:$0xf]
    %v22 = vld [vmem:[%s0 + $0x18] sm:$0xf]
    %v23 = vld [vmem:[%s0 + $0x1c] sm:$0xf]
    %v24 = vld [vmem:[%s1] sm:$0xf]
    %v25 = vld [vmem:[%s1 + $0x4] sm:$0xf]
    %v26 = vld [vmem:[%s1 + $0x8] sm:$0xf]
    %v27 = vld [vmem:[%s1 + $0xc] sm:$0xf]
    %v28 = vld [vmem:[%s1 + $0x10] sm:$0xf]
    %v29 = vld [vmem:[%s1 + $0x14] sm:$0xf]
    %v30 = vld [vmem:[%s2] sm:$0x1]
    %v32 = vlaneseq
    %v33 = vshrl.u32 %v32, 7
    %v34 = vsub.s32 0, %v33
    %v35 = vrot.slane %v30, %v34
    %v45 = vunpack.c.l.b16 %v16
    %v46 = vunpack.c.l.b16 %v17
    %v47 = vunpack.c.l.b16 %v18
    %v48 = vunpack.c.l.b16 %v19
    %v49 = vunpack.c.l.b16 %v20
    %v50 = vunpack.c.l.b16 %v21
    %v51 = vunpack.c.l.b16 %v22
    %v52 = vunpack.c.l.b16 %v23
    %v53 = vpack.c.b16 %v46, %v45
    %v54 = vpack.c.b16 %v48, %v47
    %v55 = vpack.c.b16 %v50, %v49
    %v56 = vpack.c.b16 %v52, %v51
    %v63 = vunpack.c.l.b16 %v24
    %v64 = vunpack.c.l.b16 %v25
    %v65 = vunpack.c.l.b16 %v26
    %v66 = vunpack.c.l.b16 %v27
    %v67 = vunpack.c.l.b16 %v28
    %v68 = vunpack.c.l.b16 %v29
    %v69 = vpack.c.b16 %v64, %v63
    %v70 = vpack.c.b16 %v66, %v65
    %v71 = vpack.c.b16 %v68, %v67
    %vm75 = vcmask 392192
    %v77 = vsel %vm75, %v53, 0
    %v80 = vsel %vm75, %v54, 0
    %v83 = vsel %vm75, %v55, 0
    %v86 = vsel %vm75, %v56, 0
    %88 = vmatprep.subr.bf16.mxu0 0
    %89 = vmatpush1.bf16.msra.mxu0 %v69
    %90 = vmatprep.subr.bf16.mxu0 0
    %91 = vmatpush1.bf16.msra.mxu0 %v70
    %92 = vmatprep.subr.bf16.mxu0 0
    %93 = vmatpush1.bf16.msra.mxu0 %v71
    %94 = vmatprep.subr.bf16.mxu0 0
    %95 = vmatpush1.bf16.msra.mxu0 0
    %96 = vmatprep.subr.bf16.mxu0 0
    %97 = vmatpush1.bf16.msra.mxu0 0
    %98 = vmatprep.subr.bf16.mxu0 0
    %99 = vmatpush1.bf16.msra.mxu0 0
    %100 = vmatprep.subr.bf16.mxu0 0
    %101 = vmatpush1.bf16.msra.mxu0 0
    %102 = vmatprep.subr.bf16.mxu0 0
    %103 = vmatpush1.bf16.msra.mxu0 0
    %104 = vmatprep.subr.bf16.mxu0 0
    %105 = vmatpush1.bf16.msra.mxu0 0
    %106 = vmatprep.subr.bf16.mxu0 0
    %107 = vmatpush1.bf16.msra.mxu0 0
    %108 = vmatprep.subr.bf16.mxu0 0
    %109 = vmatpush1.bf16.msra.mxu0 0
    %110 = vmatprep.subr.bf16.mxu0 0
    %111 = vmatpush1.bf16.msra.mxu0 0
    %112 = vmatprep.subr.bf16.mxu0 0
    %113 = vmatpush1.bf16.msra.mxu0 0
    %114 = vmatprep.subr.bf16.mxu0 0
    %115 = vmatpush1.bf16.msra.mxu0 0
    %116 = vmatprep.subr.bf16.mxu0 0
    %117 = vmatpush1.bf16.msra.mxu0 0
    %118 = vmatprep.subr.bf16.mxu0 0
    %119 = vmatpush1.bf16.msra.mxu0 0
    %120 = vmatprep.mubr.bf16.mxu0 0
    %121 = vmatmul.mubr.bf16.gmra.mrb[0].mxu0 %v77
    %v122 = vpop.f32.mrb[0].mxu0
    %v123 = vadd.f32 %v35, %v122
    %v124 = vpop.f32.mrb[0].mxu0
    %v125 = vpop.f32.mrb[0].mxu0
    %v126 = vadd.f32 %v35, %v125
    %v127 = vpop.f32.mrb[0].mxu0
    %128 = vmatprep.mubr.bf16.mxu0 0
    %129 = vmatmul.mubr.bf16.gmra.mrb[0].mxu0 %v80
    %v130 = vpop.f32.mrb[0].mxu0
    %v131 = vadd.f32 %v35, %v130
    %v132 = vpop.f32.mrb[0].mxu0
    %v133 = vpop.f32.mrb[0].mxu0
    %v134 = vadd.f32 %v35, %v133
    %v135 = vpop.f32.mrb[0].mxu0
    %136 = vmatprep.mubr.bf16.mxu0 0
    %137 = vmatmul.mubr.bf16.gmra.mrb[0].mxu0 %v83
    %v138 = vpop.f32.mrb[0].mxu0
    %v139 = vadd.f32 %v35, %v138
    %v140 = vpop.f32.mrb[0].mxu0
    %v141 = vpop.f32.mrb[0].mxu0
    %v142 = vadd.f32 %v35, %v141
    %v143 = vpop.f32.mrb[0].mxu0
    %144 = vmatprep.mubr.bf16.mxu0 0
    %145 = vmatmul.mubr.bf16.gmra.mrb[0].mxu0 %v86
    %v146 = vpop.f32.mrb[0].mxu0
    %v147 = vadd.f32 %v35, %v146
    %v148 = vpop.f32.mrb[0].mxu0
    %v149 = vpop.f32.mrb[0].mxu0
    %v150 = vadd.f32 %v35, %v149
    %v151 = vpop.f32.mrb[0].mxu0
    %152 = vdwg.mxu0
    %v153 = vmax.f32 %v123, 0.0
    %v154 = vmax.f32 %v126, 0.0
    %v155 = vmax.f32 %v131, 0.0
    %v156 = vmax.f32 %v134, 0.0
    %v157 = vmax.f32 %v139, 0.0
    %v158 = vmax.f32 %v142, 0.0
    %v159 = vmax.f32 %v147, 0.0
    %v160 = vmax.f32 %v150, 0.0
    %161 = vst [vmem:[#allocation2] sm:$0xff] %v153
    %162 = vst [vmem:[#allocation2 + $0x8] sm:$0xff] %v154
    %163 = vst [vmem:[#allocation2 + $0x10] sm:$0xff] %v155
    %164 = vst [vmem:[#allocation2 + $0x18] sm:$0xff] %v156
    %165 = vst [vmem:[#allocation2 + $0x20] sm:$0xff] %v157
    %166 = vst [vmem:[#allocation2 + $0x28] sm:$0xff] %v158
    %167 = vst [vmem:[#allocation2 + $0x30] sm:$0xff] %v159
    %168 = vst [vmem:[#allocation2 + $0x38] sm:$0xff] %v160
    // Predicated region
    $region14: #{tpu_custom_call.1} parent=1 // pred_check
      _
    $region15: #{tpu_custom_call.1} parent=1 // pred_check_branch
      %170 = sbr.rel (0) target = $region17
    $region16: #{tpu_custom_call.1} parent=1 // pred_region
      %s172 = ssub.s32 1024, 1024
      %173 = vsyncadd [#allocation3], %s172
      %s174 = sshll.u32 [#allocation2], 4
      %s175 = int_to_ptr.vmem [resolvable:$true] %s174
      %180 = dma.vmem_to_hbm [thread:$0]  %s175, 1024, %s3, [#allocation3], 128, 128, 8
    $region17: #{tpu_custom_call.1} parent=1 // pred_fallthru
      _
    // Predicated region
    $region18: #{tpu_custom_call.1} parent=1 // pred_check
      _
    $region19: #{tpu_custom_call.1} parent=1 // pred_check_branch
      %182 = sbr.rel (0) target = $region21
    $region20: #{tpu_custom_call.1} parent=1 // pred_region
      %183 = dma.done [#allocation3], 1024
    $region21: #{tpu_custom_call.1} parent=1 // pred_fallthru
      _
    %184 = vsyncpa [#allocation3], 1

</llo_original>
